<compile_context>
chip_gen: v6e
topology: v6e:2x2x1
jax: 0.10.0
libtpu: 0.0.40
codegen_flags: <defaults>
</compile_context>

<pallas_src>
import jax
import jax.numpy as jnp
from jax import lax
from jax.experimental import pallas as pl
from jax.experimental.pallas import tpu as pltpu


# --------------------------------------------------------------------------- #
# Kernels
# --------------------------------------------------------------------------- #
def _make_flat_kernel(H, W):
    """Lane-dense kernel: block is (TB, H*W); flat lane index f = i*W + j."""
    HW = H * W

    def kernel(x_ref, o_ref):
        x = x_ref[...].astype(jnp.float32)                     # (TB, H*W)
        flat = lax.broadcasted_iota(jnp.int32, x.shape, 1)     # f
        col = flat % W                                         # j = f % W
        not_top = flat >= W                                    # i > 0
        not_bot = flat < (HW - W)                              # i < H-1
        not_left = col > 0                                     # j > 0
        not_right = col < (W - 1)                              # j < W-1

        def shifted(delta, mask):
            # x_flat[f + delta], zero outside the image (roll wraps within each
            # image's own HW-long lane row -> wrapped values are masked off).
            return jnp.where(mask, pltpu.roll(x, shift=(-delta) % HW, axis=1), 0.0)

        x_ip1 = shifted(+W, not_bot)     # x[i+1, j]
        x_im1 = shifted(-W, not_top)     # x[i-1, j]
        x_jp1 = shifted(+1, not_right)   # x[i, j+1]
        x_jm1 = shifted(-1, not_left)    # x[i, j-1]

        v = x_ip1 - x_im1                # vertical gradient  (kernel_v)
        h = x_jp1 - x_jm1                # horizontal gradient (kernel_h)
        o_ref[...] = jnp.sqrt(v * v + h * h + 1e-6).astype(o_ref.dtype)

    return kernel


def _make_plane_kernel(H, W):
    """Fallback kernel: block is (TB, 1, H, W); per-image 2D rolls (proven path)."""

    def kernel(x_ref, o_ref):
        tb = x_ref.shape[0]
        row = lax.broadcasted_iota(jnp.int32, (H, W), 0)
        col = lax.broadcasted_iota(jnp.int32, (H, W), 1)
        not_top, not_bot = row > 0, row < H - 1
        not_left, not_right = col > 0, col < W - 1
        for b in range(tb):                                    # small static unroll
            x = x_ref[b, 0].astype(jnp.float32)                # (H, W)
            x_ip1 = jnp.where(not_bot, pltpu.roll(x, shift=(H - 1) % H, axis=0), 0.0)
            x_im1 = jnp.where(not_top, pltpu.roll(x, shift=1 % H, axis=0), 0.0)
            x_jp1 = jnp.where(not_right, pltpu.roll(x, shift=(W - 1) % W, axis=1), 0.0)
            x_jm1 = jnp.where(not_left, pltpu.roll(x, shift=1 % W, axis=1), 0.0)
            v = x_ip1 - x_im1
            h = x_jp1 - x_jm1
            o_ref[b, 0] = jnp.sqrt(v * v + h * h + 1e-6).astype(o_ref.dtype)

    return kernel


# --------------------------------------------------------------------------- #
# Block-size / VMEM heuristics
# --------------------------------------------------------------------------- #
def _vmem_capacity_bytes():
    cap = 64 << 20                   # conservative default = v7x physical VMEM
    try:
        info = pltpu.get_tpu_info()
        cap = int(getattr(info, "vmem_capacity_bytes", cap))
    except Exception:
        pass
    return cap


def _fast_batch_block(B, per_img_bytes, target_bytes, sublane):
    """Images per block for the lane-dense path.

    The (TB, H*W) block puts the batch on sublanes, so TB must be a multiple of
    the sublane tile (8 for f32) or equal to B, and must divide B.  Returns
    None if no suitable TB exists (caller falls back to the plane layout).
    """
    budget = max(1, target_bytes // max(per_img_bytes, 1))
    best = None
    t = sublane
    while t <= min(B, budget):
        if B % t == 0:
            best = t
        t += sublane
    if best is not None:
        # Prefer >= 2 grid steps: one per TensorCore on v7x, and the BlockSpec
        # pipeline needs >= 2 steps to overlap prefetch/writeback with compute.
        while best > sublane and B // best < 2:
            t = best - sublane
            while t >= sublane and B % t:
                t -= sublane
            if t < sublane:
                break
            best = t
        return best
    if B * per_img_bytes <= target_bytes:
        return B                     # tiny batch: one step, TB == B is legal
    return None


# --------------------------------------------------------------------------- #
# Public wrapper
# --------------------------------------------------------------------------- #
def get_gradientmask_nopadding(x):
    """x: (B, C, H, W) -> (B, 1, H, W), matching the PyTorch module."""
    B, C, H, W = x.shape
    HW = H * W
    itemsize = jnp.dtype(x.dtype).itemsize
    per_img_bytes = HW * itemsize
    sublane = 8 * max(1, 4 // itemsize)        # f32: 8, bf16: 16, int8: 32

    vmem_cap = _vmem_capacity_bytes()
    # ~6.4 MiB input blocks on v7x (64 MiB VMEM), 8 MiB on v5e/v6e (128 MiB).
    target_block_bytes = min(8 << 20, max(1 << 20, vmem_cap // 10))

    # Advisory cost hint (mem-bound: read channel 0 + write output).
    cost = pl.CostEstimate(
        flops=8 * B * HW,
        transcendentals=B * HW,
        bytes_accessed=2 * B * HW * itemsize,
    )

    def compiler_params(block_in_bytes, block_out_bytes):
        # Double-buffered in + out blocks + compiler scratch slack; always set,
        # never below 32 MiB (>= default scoped limit on every generation).
        vmem_need = 2 * (block_in_bytes + block_out_bytes) + (4 << 20)
        return pltpu.CompilerParams(
            dimension_semantics=("parallel",),
            vmem_limit_bytes=int(max(vmem_need, min(32 << 20, vmem_cap))),
        )

    tb = _fast_batch_block(B, per_img_bytes, target_block_bytes, sublane) \
        if HW % 128 == 0 else None

    if tb is not None:
        # ---- lane-dense fast path: (TB, H*W) blocks ------------------------ #
        x_flat = x.reshape(B, C * HW)          # free: NCHW is contiguous
        padded_tb = -(-tb // sublane) * sublane
        blk = padded_tb * HW * itemsize
        out_flat = pl.pallas_call(
            _make_flat_kernel(H, W),
            out_shape=jax.ShapeDtypeStruct((B, HW), x.dtype),
            grid=(B // tb,),
            in_specs=[pl.BlockSpec((tb, HW), lambda b: (b, 0))],   # channel 0 only
            out_specs=pl.BlockSpec((tb, HW), lambda b: (b, 0)),
            compiler_params=compiler_params(blk, blk),
            cost_estimate=cost,
        )(x_flat)
        return out_flat.reshape(B, 1, H, W)

    # ---- fallback: (TB, 1, H, W) whole-plane blocks, per-image stencil ----- #
    max_unroll = 8
    tb = max(1, min(B, max_unroll, target_block_bytes // max(per_img_bytes, 1)))
    while B % tb:
        tb -= 1
    padded_plane = (-(-H // 8) * 8) * (-(-W // 128) * 128) * itemsize
    blk = tb * padded_plane
    # TODO(synk): a single image larger than the block budget would need an
    # H-tiled path with a 1-row halo; not required at these shapes.
    return pl.pallas_call(
        _make_plane_kernel(H, W),
        out_shape=jax.ShapeDtypeStruct((B, 1, H, W), x.dtype),
        grid=(B // tb,),
        in_specs=[pl.BlockSpec((tb, 1, H, W), lambda b: (b, 0, 0, 0))],
        out_specs=pl.BlockSpec((tb, 1, H, W), lambda b: (b, 0, 0, 0)),
        compiler_params=compiler_params(blk, blk),
        cost_estimate=cost,
    )(x)


# --------------------------------------------------------------------------- #
# Reference + smoke test
# --------------------------------------------------------------------------- #
def _reference(x):
    """Pure-JAX reference mirroring the PyTorch forward pass exactly."""
    x0 = x[:, 0:1]                                       # (B, 1, H, W)
    xp = jnp.pad(x0, ((0, 0), (0, 0), (1, 1), (1, 1)))
    v = xp[:, :, 2:, 1:-1] - xp[:, :, :-2, 1:-1]         # kernel_v stencil
    h = xp[:, :, 1:-1, 2:] - xp[:, :, 1:-1, :-2]         # kernel_h stencil
    return jnp.sqrt(v * v + h * h + 1e-6)


if __name__ == "__main__":
    key = jax.random.PRNGKey(0)
    B, C, H, W = 2, 4, 16, 16
    x = jax.random.normal(key, (B, C, H, W), dtype=jnp.float32)

    out = jax.block_until_ready(get_gradientmask_nopadding(x))
    ref = _reference(x)

    assert out.shape == (B, 1, H, W), out.shape
    assert jnp.allclose(out, ref, atol=1e-5, rtol=1e-5), \
        f"max err {jnp.max(jnp.abs(out - ref))}"

    print("KERNEL_OK")
</pallas_src>

<mosaic_0001>
module attributes {stable_mosaic.version = 11 : i64} {
  func.func @kernel(%arg0: i32, %arg1: memref<2x256xf32, #tpu.memory_space<vmem>>, %arg2: memref<2x256xf32, #tpu.memory_space<vmem>>) attributes {dimension_semantics = [#tpu.dimension_semantics<parallel>], iteration_bounds = array<i64: 1>, scalar_prefetch = 0 : i64, scratch_operands = 0 : i64, tpu.core_type = #tpu.core_type<tc>, window_params = [{transform_indices = @transform_0, window_bounds = array<i64: 2, 256>}, {transform_indices = @transform_1, window_bounds = array<i64: 2, 256>}]} {
    %c0 = arith.constant 0 : index
    %c0_0 = arith.constant 0 : index
    %0 = vector.load %arg1[%c0, %c0_0] : memref<2x256xf32, #tpu.memory_space<vmem>>, vector<2x256xf32>
    %1 = tpu.iota {dimensions = array<i32: 1>} : vector<2x256xi32>
    %c16_i32 = arith.constant 16 : i32
    %c0_i32 = arith.constant 0 : i32
    %2 = arith.cmpi eq, %c16_i32, %c0_i32 : i32
    %c1_i32 = arith.constant 1 : i32
    %3 = arith.select %2, %c1_i32, %c16_i32 : i32
    %4 = vector.broadcast %3 : i32 to vector<2x256xi32>
    %5 = arith.remsi %1, %4 : vector<2x256xi32>
    %c0_i32_1 = arith.constant 0 : i32
    %6 = vector.broadcast %c0_i32_1 : i32 to vector<2x256xi32>
    %7 = arith.cmpi ne, %5, %6 : vector<2x256xi32>
    %c0_i32_2 = arith.constant 0 : i32
    %8 = vector.broadcast %c0_i32_2 : i32 to vector<2x256xi32>
    %9 = arith.cmpi slt, %5, %8 : vector<2x256xi32>
    %c0_i32_3 = arith.constant 0 : i32
    %10 = arith.cmpi slt, %3, %c0_i32_3 : i32
    %11 = vector.broadcast %10 : i1 to vector<2x256xi1>
    %12 = vector.broadcast %11 : vector<2x256xi1> to vector<2x256xi1>
    %13 = arith.xori %9, %12 : vector<2x256xi1>
    %14 = arith.andi %13, %7 : vector<2x256xi1>
    %15 = vector.broadcast %3 : i32 to vector<2x256xi32>
    %16 = arith.addi %5, %15 : vector<2x256xi32>
    %17 = arith.select %14, %16, %5 : vector<2x256xi1>, vector<2x256xi32>
    %c16_i32_4 = arith.constant 16 : i32
    %18 = vector.broadcast %c16_i32_4 : i32 to vector<2x256xi32>
    %19 = arith.cmpi sge, %1, %18 : vector<2x256xi32>
    %c240_i32 = arith.constant 240 : i32
    %20 = vector.broadcast %c240_i32 : i32 to vector<2x256xi32>
    %21 = arith.cmpi slt, %1, %20 : vector<2x256xi32>
    %c0_i32_5 = arith.constant 0 : i32
    %22 = vector.broadcast %c0_i32_5 : i32 to vector<2x256xi32>
    %23 = arith.cmpi sgt, %17, %22 : vector<2x256xi32>
    %c15_i32 = arith.constant 15 : i32
    %24 = vector.broadcast %c15_i32 : i32 to vector<2x256xi32>
    %25 = arith.cmpi slt, %17, %24 : vector<2x256xi32>
    %c240_i32_6 = arith.constant 240 : i32
    %26 = tpu.dynamic_rotate %0 by %c240_i32_6 dim 1 : vector<2x256xf32>, i32 -> vector<2x256xf32>
    %cst = arith.constant 0.000000e+00 : f32
    %27 = vector.broadcast %cst : f32 to vector<2x256xf32>
    %28 = arith.select %21, %26, %27 : vector<2x256xi1>, vector<2x256xf32>
    %c16_i32_7 = arith.constant 16 : i32
    %29 = tpu.dynamic_rotate %0 by %c16_i32_7 dim 1 : vector<2x256xf32>, i32 -> vector<2x256xf32>
    %cst_8 = arith.constant 0.000000e+00 : f32
    %30 = vector.broadcast %cst_8 : f32 to vector<2x256xf32>
    %31 = arith.select %19, %29, %30 : vector<2x256xi1>, vector<2x256xf32>
    %c255_i32 = arith.constant 255 : i32
    %32 = tpu.dynamic_rotate %0 by %c255_i32 dim 1 : vector<2x256xf32>, i32 -> vector<2x256xf32>
    %cst_9 = arith.constant 0.000000e+00 : f32
    %33 = vector.broadcast %cst_9 : f32 to vector<2x256xf32>
    %34 = arith.select %25, %32, %33 : vector<2x256xi1>, vector<2x256xf32>
    %c1_i32_10 = arith.constant 1 : i32
    %35 = tpu.dynamic_rotate %0 by %c1_i32_10 dim 1 : vector<2x256xf32>, i32 -> vector<2x256xf32>
    %cst_11 = arith.constant 0.000000e+00 : f32
    %36 = vector.broadcast %cst_11 : f32 to vector<2x256xf32>
    %37 = arith.select %23, %35, %36 : vector<2x256xi1>, vector<2x256xf32>
    %38 = arith.subf %28, %31 : vector<2x256xf32>
    %39 = arith.subf %34, %37 : vector<2x256xf32>
    %40 = arith.mulf %38, %38 : vector<2x256xf32>
    %41 = arith.mulf %39, %39 : vector<2x256xf32>
    %42 = arith.addf %40, %41 : vector<2x256xf32>
    %cst_12 = arith.constant 9.99999997E-7 : f32
    %43 = vector.broadcast %cst_12 : f32 to vector<2x256xf32>
    %44 = arith.addf %42, %43 : vector<2x256xf32>
    %45 = math.sqrt %44 : vector<2x256xf32>
    %c0_13 = arith.constant 0 : index
    %c0_14 = arith.constant 0 : index
    %46 = vector.load %arg2[%c0_13, %c0_14] : memref<2x256xf32, #tpu.memory_space<vmem>>, vector<2x256xf32>
    tpu.vector_store %arg2[%c0_13, %c0_14], %45 {strides = array<i32>} : memref<2x256xf32, #tpu.memory_space<vmem>>, vector<2x256xf32>,
    return
  }
  func.func @transform_0(%arg0: i32) -> (i32, i32) {
    %c0_i32 = arith.constant 0 : i32
    %c0_i32_0 = arith.constant 0 : i32
    return %arg0, %c0_i32 : i32, i32
  }
  func.func @transform_1(%arg0: i32) -> (i32, i32) {
    %c0_i32 = arith.constant 0 : i32
    %c0_i32_0 = arith.constant 0 : i32
    return %arg0, %c0_i32 : i32, i32
  }
}

</mosaic_0001>

<llo_original>
// kernel: tpu_custom_call.1
$region0: #{tpu_custom_call.1}
  #allocation0 [shape = 'u32[]', space=smem, size = 0x4, offset = 0x4, fixed_abs, tag = 'smem constant byte address 0x4 - core index']
  #allocation1 [shape = 'u32[144,128]{1,0:T(1,128)}', space=vmem, size = 0x12000, scoped, tag = 'internal scratch']
  %s0 = inlined_call_operand.hbm [shape: f32[2,1024], index: 0, kind: input, shape index: {}]
  %s1 = inlined_call_operand.hbm [shape: f32[2,256], index: 1, kind: output, shape index: {}]
  %s2 = sld [smem:[#allocation0]]
  $region18: #{tpu_custom_call.1} parent=0
    _
  %s4 = ssub.s32 1, %s2
  %s5 = scalar_select 0, %s4, %s2
  $region1: #{tpu_custom_call.1} parent=0
    #allocation2 [shape = 'u8[2048]{0}', space=vmem, size = 0x800, scoped, tag = 'input window, operand 0, single buffered']
    #allocation3 [shape = 's32[1]{0}', space=sflag, size = 0x4, scoped, tag = 'scoped memory for tpu_custom_call.1']
    #allocation4 [shape = 's32[1]{0}', space=sflag, size = 0x4, scoped, tag = 'scoped memory for tpu_custom_call.1']
    #allocation5 [shape = 'u8[2048]{0}', space=vmem, size = 0x800, scoped, tag = 'output window, operand 0, single buffered']
    %6 = vsyncpa [#allocation3], 0
    %7 = vsyncpa [#allocation4], 0
    // Predicated region
    $region2: #{tpu_custom_call.1} parent=1 // pred_check
      _
    $region3: #{tpu_custom_call.1} parent=1 // pred_check_branch
      %9 = sbr.rel (0) target = $region5
    $region4: #{tpu_custom_call.1} parent=1 // pred_region
      %s11 = ssub.s32 64, 64
      %12 = vsyncadd [#allocation3], %s11
      %s14 = sshll.u32 [#allocation2], 4
      %s15 = int_to_ptr.vmem [resolvable:$true] %s14
      %17 = dma.hbm_to_vmem [thread:$0]  %s0, 64, %s15, [#allocation3]
    $region5: #{tpu_custom_call.1} parent=1 // pred_fallthru
      _
    // Predicated region
    $region6: #{tpu_custom_call.1} parent=1 // pred_check
      _
    $region7: #{tpu_custom_call.1} parent=1 // pred_check_branch
      %19 = sbr.rel (0) target = $region9
    $region8: #{tpu_custom_call.1} parent=1 // pred_region
      %20 = dma.done [#allocation3], 64
    $region9: #{tpu_custom_call.1} parent=1 // pred_fallthru
      _
    %v21 = vld [vmem:[#allocation2] sm:$0xf]
    %v22 = vlaneseq
    %v23 = vand.u32 %v22, 127
    %v24 = vadd.s32 %v23, 128
    %vm25 = vcmp.lt.s32.totalorder %v23, 0
    %v26 = vsub.s32 0, %v23
    %v27 = vsel %vm25, %v26, %v23
    %v28 = vshrl.u32 %v27, 4
    %v29 = vand.u32 %v27, 15
    %v30 = vsub.s32 0, %v29
    %v31 = vsel %vm25, %v30, %v29
    %vm32 = vcmp.lt.s32.totalorder %v24, 0
    %v33 = vsub.s32 0, %v24
    %v34 = vsel %vm32, %v33, %v24
    %v35 = vshrl.u32 %v34, 4
    %v36 = vand.u32 %v34, 15
    %v37 = vsub.s32 0, %v36
    %v38 = vsel %vm32, %v37, %v36
    %vm39 = vcmp.ne.s32.totalorder %v31, 0
    %vm40 = vcmp.ne.s32.totalorder %v38, 0
    %vm41 = vcmp.lt.s32.totalorder %v31, 0
    %vm42 = vcmp.lt.s32.totalorder %v38, 0
    %vm43 = vmand %vm41, %vm39
    %vm44 = vmand %vm42, %vm40
    %v45 = vadd.s32 %v31, 16
    %v46 = vadd.s32 %v38, 16
    %v47 = vsel %vm43, %v45, %v31
    %v48 = vsel %vm44, %v46, %v38
    %vm49 = vcmp.ge.s32.totalorder %v23, 16
    %vm50 = vcmp.ge.s32.totalorder %v24, 16
    %vm51 = vcmp.lt.s32.totalorder %v23, 240
    %vm52 = vcmp.lt.s32.totalorder %v24, 240
    %vm53 = vcmp.gt.s32.totalorder %v47, 0
    %vm54 = vcmp.gt.s32.totalorder %v48, 0
    %vm55 = vcmp.lt.s32.totalorder %v47, 15
    %vm56 = vcmp.lt.s32.totalorder %v48, 15
    %v59 = vunpack.c.l.s4 1983009808
    %v60 = vunpack.c.0.s8 %v59
    %v61 = vlaneseq
    %v62 = vshrl.u32 %v61, 7
    %v63 = vsub.s32 %v60, %v62
    %v64 = vrot.slane %v21, %v63
    %v65 = vcombine.high %v64, %v64
    %68 = vrot.lane.b32.xlu0 %v64, 112
    %v69 = vpop.permute.xlu0 %68
    %70 = vrot.lane.b32.xlu0 %v65, 112
    %v71 = vpop.permute.xlu0 %70
    %vm72 = vcmp.lt.s32.totalorder %v23, 112
    %v73 = vsel %vm72, %v69, %v71
    %v74 = vsel %vm72, %v71, %v69
    %v75 = vsel %vm51, %v73, 0.0
    %v76 = vsel %vm52, %v74, 0.0
    %77 = vrot.lane.b32.xlu0 %v64, 16
    %v78 = vpop.permute.xlu0 %77
    %79 = vrot.lane.b32.xlu0 %v65, 16
    %v80 = vpop.permute.xlu0 %79
    %vm81 = vcmp.lt.s32.totalorder %v23, 16
    %v82 = vsel %vm81, %v78, %v80
    %v83 = vsel %vm81, %v80, %v78
    %v84 = vsel %vm49, %v83, 0.0
    %v85 = vsel %vm50, %v82, 0.0
    %86 = vrot.lane.b32.xlu0 %v64, 127
    %v87 = vpop.permute.xlu0 %86
    %88 = vrot.lane.b32.xlu0 %v65, 127
    %v89 = vpop.permute.xlu0 %88
    %vm90 = vcmp.lt.s32.totalorder %v23, 127
    %v91 = vsel %vm90, %v87, %v89
    %v92 = vsel %vm90, %v89, %v87
    %v93 = vsel %vm55, %v91, 0.0
    %v94 = vsel %vm56, %v92, 0.0
    %95 = vrot.lane.b32.xlu0 %v64, 1
    %v96 = vpop.permute.xlu0 %95
    %97 = vrot.lane.b32.xlu0 %v65, 1
    %v98 = vpop.permute.xlu0 %97
    %vm99 = vcmp.lt.s32.totalorder %v23, 1
    %v100 = vsel %vm99, %v96, %v98
    %v101 = vsel %vm99, %v98, %v96
    %v102 = vsel %vm53, %v101, 0.0
    %v103 = vsel %vm54, %v100, 0.0
    %v104 = vsub.f32 %v75, %v84
    %v105 = vsub.f32 %v76, %v85
    %v106 = vsub.f32 %v93, %v102
    %v107 = vsub.f32 %v94, %v103
    %v108 = vmul.f32 %v104, %v104
    %v109 = vmul.f32 %v105, %v105
    %v110 = vmul.f32 %v106, %v106
    %v111 = vmul.f32 %v107, %v107
    %v112 = vadd.f32 %v108, %v110
    %v113 = vadd.f32 %v109, %v111
    %v114 = vadd.f32 %v112, 1e-06
    %v115 = vadd.f32 %v113, 1e-06
    %v116 = vrsqrt.pop %v114
    %v117 = vmul.f32 %v114, %v116
    %vm118 = vcmp.eq.f32.partialorder %v114, inf
    %v119 = vsel %vm118, %v114, %v117
    %vm120 = vcmp.eq.f32.partialorder %v114, 0.0
    %v121 = vand.u32 %v114, 2147483648
    %v122 = vsel %vm120, %v121, %v119
    %v123 = vrsqrt.pop %v115
    %v124 = vmul.f32 %v115, %v123
    %vm125 = vcmp.eq.f32.partialorder %v115, inf
    %v126 = vsel %vm125, %v115, %v124
    %vm127 = vcmp.eq.f32.partialorder %v115, 0.0
    %v128 = vand.u32 %v115, 2147483648
    %v129 = vsel %vm127, %v128, %v126
    %v132 = vcombine.low %v122, %v129
    %v134 = vunpack.c.l.s4 1983009808
    %v135 = vunpack.c.0.s8 %v134
    %v136 = vlaneseq
    %v137 = vshrl.u32 %v136, 7
    %v138 = vsub.s32 %v135, %v137
    %v139 = vrot.slane %v132, %v138
    %141 = vst [vmem:[#allocation5] sm:$0xf] %v139
    // Predicated region
    $region10: #{tpu_custom_call.1} parent=1 // pred_check
      _
    $region11: #{tpu_custom_call.1} parent=1 // pred_check_branch
      %143 = sbr.rel (0) target = $region13
    $region12: #{tpu_custom_call.1} parent=1 // pred_region
      %s145 = ssub.s32 64, 64
      %146 = vsyncadd [#allocation4], %s145
      %s148 = sshll.u32 [#allocation5], 4
      %s149 = int_to_ptr.vmem [resolvable:$true] %s148
      %151 = dma.vmem_to_hbm [thread:$0]  %s149, 64, %s1, [#allocation4]
    $region13: #{tpu_custom_call.1} parent=1 // pred_fallthru
      _
    // Predicated region
    $region14: #{tpu_custom_call.1} parent=1 // pred_check
      _
    $region15: #{tpu_custom_call.1} parent=1 // pred_check_branch
      %153 = sbr.rel (0) target = $region17
    $region16: #{tpu_custom_call.1} parent=1 // pred_region
      %154 = dma.done [#allocation4], 64
    $region17: #{tpu_custom_call.1} parent=1 // pred_fallthru
      _
    %155 = vsyncpa [#allocation3], 1
    %156 = vsyncpa [#allocation4], 1

</llo_original>
